<compile_context>
chip_gen: v6e
topology: v6e:2x2x1
jax: 0.10.0
libtpu: 0.0.40
codegen_flags: <defaults>
</compile_context>

<pallas_src>
import functools
import math

import jax
import jax.numpy as jnp
from jax import lax
from jax.experimental import pallas as pl
from jax.experimental.pallas import tpu as pltpu

_LANES = 128
_SUBLANES = 8
_X_PAD = -1e9    # sentinel logit; with target 0 it yields bce == 0 exactly


def _round_up(x, m):
    return ((x + m - 1) // m) * m


def _focal_loss_kernel(x_ref, t_ref, o_ref, acc_ref, *, alpha, gamma,
                       valid_rows, block_rows):
    i = pl.program_id(0)               # chunk axis (CORE_PARALLEL on v7x)
    j = pl.program_id(1)               # sequential reduction axis
    n_j = pl.num_programs(1)

    @pl.when(j == 0)
    def _():
        acc_ref[...] = jnp.zeros_like(acc_ref)

    x = x_ref[...].astype(jnp.float32)
    t = t_ref[...].astype(jnp.float32)

    # Numerically stable BCE-with-logits (== F.binary_cross_entropy_with_logits):
    #   bce = max(x, 0) - x*t + log1p(exp(-|x|))
    e = jnp.exp(-jnp.abs(x))
    bce = jnp.maximum(x, 0.0) - x * t + jnp.log1p(e)

    # For hard {0,1} targets, 1 - pt = 1 - exp(-bce) simplifies algebraically to
    #   where(sign(x) matches target, e, 1) / (1 + e)
    # -> no second exp, and the divide is a single approx EUP reciprocal.
    # TODO(synk): soft / label-smoothed targets need the general exp(-bce) path.
    match = (x >= 0.0) == (t >= 0.5)
    om = jnp.where(match, e, 1.0) * pl.reciprocal(1.0 + e, approx=True)

    g = float(gamma)
    if g == 2.0:                                   # default gamma: 1 VPU mul
        focal_w = alpha * (om * om)
    elif g == int(g) and g >= 0.0:
        focal_w = alpha * lax.integer_pow(om, int(g))
    else:
        focal_w = alpha * om ** g
    focal = focal_w * bce                          # (block_rows, 128) f32

    # Rows covered by this logical block.  Only the globally-last (possibly
    # ragged / duplicated) block needs masking -- rows >= valid_rows hold
    # unspecified data.  Row indices (not flat element indices) keep int32
    # safe up to ~2^31 * 128 elements.
    blk = i * n_j + j
    row0 = blk * block_rows

    @pl.when(row0 + block_rows <= valid_rows)
    def _():                                       # hot path: no mask at all
        acc_ref[...] += focal.reshape(
            block_rows // _SUBLANES, _SUBLANES, _LANES).sum(axis=0)

    @pl.when(row0 + block_rows > valid_rows)
    def _():                                       # tail / out-of-range block
        r = lax.broadcasted_iota(jnp.int32, (block_rows, _LANES), 0)
        masked = jnp.where(row0 + r < valid_rows, focal, 0.0)
        acc_ref[...] += masked.reshape(
            block_rows // _SUBLANES, _SUBLANES, _LANES).sum(axis=0)

    @pl.when(j == n_j - 1)
    def _():
        o_ref[0] = acc_ref[...]


def focal_loss(inputs, targets, *, alpha=1.0, gamma=2.0, reduction="mean",
               block_rows=2048, num_chunks=1):
    """Pallas TPU focal loss over logits of any shape; targets must be {0, 1}.

    alpha is a plain scalar multiplier (matches the reference nn.Module), not
    the class-balanced alpha_t variant.  Set num_chunks=2 on v7x to shard the
    reduction across both TensorCores (CORE_PARALLEL); keep 1 on v5e/v6e.
    """
    assert inputs.shape == targets.shape
    if reduction not in ("mean", "sum"):
        # TODO(synk): reduction='none' needs a full-size output layout.
        raise NotImplementedError("only 'mean' and 'sum' reductions implemented")

    total = int(math.prod(inputs.shape))
    x = jnp.ravel(inputs)
    t = jnp.ravel(targets)

    # Lane/sublane-dense layout: (rows, 128) with rows a multiple of 8.  Pad
    # only to the next (8,128) tile with sentinels that contribute exactly 0
    # loss (<= 1023 elements; no pad, no copy when already aligned).
    padded_total = _round_up(max(total, 1), _SUBLANES * _LANES)
    pad = padded_total - total
    if pad:
        x = jnp.pad(x, (0, pad), constant_values=_X_PAD)
        t = jnp.pad(t, (0, pad), constant_values=0)
    rows = padded_total // _LANES
    x2 = x.reshape(rows, _LANES)
    t2 = t.reshape(rows, _LANES)

    # Block sizing: multiple of 32 rows (bf16/int8 tile friendly), v7x-safe cap.
    block_rows = int(min(max(block_rows, 32), 8192))
    eff_rows = _round_up(block_rows, 32)
    if eff_rows >= rows:
        eff_rows = rows                 # single full-dim block (always legal)
    n_blocks = pl.cdiv(rows, eff_rows)
    n_chunks = max(1, min(int(num_chunks), n_blocks))
    steps = pl.cdiv(n_blocks, n_chunks)
    last_blk = n_blocks - 1

    def in_map(i, j):
        # Clamp so no block DMA ever starts past the array; duplicated blocks
        # are fully masked out inside the kernel.
        return (jnp.minimum(i * steps + j, last_blk), 0)

    # VMEM budget: 2 inputs x 2 pipeline buffers x block + tiny acc + headroom.
    in_blk = eff_rows * _LANES * x2.dtype.itemsize
    tg_blk = eff_rows * _LANES * t2.dtype.itemsize
    vmem_limit = int(2 * (in_blk + tg_blk) + (4 << 20))

    chunk_sem = pltpu.CORE_PARALLEL if n_chunks > 1 else "arbitrary"

    kernel = functools.partial(
        _focal_loss_kernel, alpha=float(alpha), gamma=float(gamma),
        valid_rows=rows, block_rows=eff_rows)

    partials = pl.pallas_call(
        kernel,
        out_shape=jax.ShapeDtypeStruct((n_chunks, _SUBLANES, _LANES),
                                       jnp.float32),
        grid_spec=pltpu.PrefetchScalarGridSpec(
            num_scalar_prefetch=0,
            grid=(n_chunks, steps),
            in_specs=[
                pl.BlockSpec((eff_rows, _LANES), in_map),
                pl.BlockSpec((eff_rows, _LANES), in_map),
            ],
            out_specs=pl.BlockSpec((1, _SUBLANES, _LANES),
                                   lambda i, j: (i, 0, 0)),
            scratch_shapes=[pltpu.VMEM((_SUBLANES, _LANES), jnp.float32)],
        ),
        compiler_params=pltpu.CompilerParams(
            dimension_semantics=(chunk_sem, "arbitrary"),
            vmem_limit_bytes=vmem_limit),
        cost_estimate=pl.CostEstimate(
            flops=20 * total,
            transcendentals=3 * total,            # exp, log1p, reciprocal
            bytes_accessed=int(x2.nbytes) + int(t2.nbytes)
            + n_chunks * _SUBLANES * _LANES * 4),
    )(x2, t2)

    s = jnp.sum(partials)
    if reduction == "mean":
        return s / jnp.float32(total)
    return s  # 'sum'


def _focal_loss_ref(inputs, targets, alpha=1.0, gamma=2.0, reduction="mean"):
    x = inputs.astype(jnp.float32)
    t = targets.astype(jnp.float32)
    bce = jnp.maximum(x, 0.0) - x * t + jnp.log1p(jnp.exp(-jnp.abs(x)))
    pt = jnp.exp(-bce)
    fl = alpha * (1.0 - pt) ** gamma * bce
    return jnp.mean(fl) if reduction == "mean" else jnp.sum(fl)


if __name__ == "__main__":
    key = jax.random.PRNGKey(0)
    k1, k2 = jax.random.split(key)

    # Small multi-label logits batch (tile-aligned: no padding, no copy).
    N, C = 16, 128
    logits = jax.random.normal(k1, (N, C), dtype=jnp.float32) * 2.0
    targets = (jax.random.uniform(k2, (N, C)) > 0.5).astype(jnp.float32)
    loss = jax.block_until_ready(focal_loss(logits, targets, alpha=1.0, gamma=2.0))
    ref = _focal_loss_ref(logits, targets, alpha=1.0, gamma=2.0)
    assert jnp.allclose(loss, ref, rtol=2e-3, atol=1e-5), (loss, ref)

    # Ragged size: exercises the sentinel pad (< one tile) path.
    N2, C2 = 37, 50
    logits2 = jax.random.normal(k1, (N2, C2), dtype=jnp.float32) * 2.0
    targets2 = (jax.random.uniform(k2, (N2, C2)) > 0.5).astype(jnp.float32)
    loss2 = jax.block_until_ready(focal_loss(logits2, targets2))
    ref2 = _focal_loss_ref(logits2, targets2)
    assert jnp.allclose(loss2, ref2, rtol=2e-3, atol=1e-5), (loss2, ref2)

    # Multi-step reduction with a ragged final Pallas block, narrow dtypes
    # (bf16 logits + int8 targets) and 'sum' reduction.
    N3, C3 = 300, 128
    logits3 = (jax.random.normal(k1, (N3, C3), dtype=jnp.float32) * 2.0
               ).astype(jnp.bfloat16)
    targets3 = (jax.random.uniform(k2, (N3, C3)) > 0.5).astype(jnp.int8)
    loss3 = jax.block_until_ready(
        focal_loss(logits3, targets3, block_rows=64, reduction="sum"))
    ref3 = _focal_loss_ref(logits3.astype(jnp.float32),
                           targets3.astype(jnp.float32), reduction="sum")
    assert jnp.allclose(loss3, ref3, rtol=2e-3, atol=1e-2), (loss3, ref3)

    print("KERNEL_OK")
</pallas_src>

<mosaic_0001>
module attributes {stable_mosaic.version = 11 : i64} {
  func.func @_focal_loss_kernel(%arg0: i32, %arg1: i32, %arg2: memref<16x128xf32, #tpu.memory_space<vmem>>, %arg3: memref<16x128xf32, #tpu.memory_space<vmem>>, %arg4: memref<1x8x128xf32, #tpu.memory_space<vmem>>, %arg5: memref<8x128xf32, #tpu.memory_space<vmem>>) attributes {dimension_semantics = [#tpu.dimension_semantics<arbitrary>, #tpu.dimension_semantics<arbitrary>], iteration_bounds = array<i64: 1, 1>, scalar_prefetch = 0 : i64, scratch_operands = 1 : i64, tpu.core_type = #tpu.core_type<tc>, window_params = [{transform_indices = @transform_0, window_bounds = array<i64: 16, 128>}, {transform_indices = @transform_1, window_bounds = array<i64: 16, 128>}, {transform_indices = @transform_2, window_bounds = array<i64: 1, 8, 128>}]} {
    %c0_i32 = arith.constant 0 : i32
    %0 = arith.cmpi eq, %arg1, %c0_i32 : i32
    %1 = arith.extui %0 : i1 to i32
    %c0_i32_0 = arith.constant 0 : i32
    %2 = arith.cmpi ne, %1, %c0_i32_0 : i32
    scf.if %2 {
      %cst_19 = arith.constant 0.000000e+00 : f32
      %45 = vector.broadcast %cst_19 : f32 to vector<8x128xf32>
      %c0_20 = arith.constant 0 : index
      %c0_21 = arith.constant 0 : index
      %46 = vector.load %arg5[%c0_20, %c0_21] : memref<8x128xf32, #tpu.memory_space<vmem>>, vector<8x128xf32>
      tpu.vector_store %arg5[%c0_20, %c0_21], %45 {strides = array<i32>} : memref<8x128xf32, #tpu.memory_space<vmem>>, vector<8x128xf32>,
    } else {
    }
    %c0 = arith.constant 0 : index
    %c0_1 = arith.constant 0 : index
    %3 = vector.load %arg2[%c0, %c0_1] : memref<16x128xf32, #tpu.memory_space<vmem>>, vector<16x128xf32>
    %c0_2 = arith.constant 0 : index
    %c0_3 = arith.constant 0 : index
    %4 = vector.load %arg3[%c0_2, %c0_3] : memref<16x128xf32, #tpu.memory_space<vmem>>, vector<16x128xf32>
    %5 = math.absf %3 : vector<16x128xf32>
    %cst = arith.constant 0.000000e+00 : f32
    %6 = vector.broadcast %cst : f32 to vector<16x128xf32>
    %7 = arith.subf %6, %5 : vector<16x128xf32>
    %8 = math.exp %7 : vector<16x128xf32>
    %cst_4 = arith.constant 0.000000e+00 : f32
    %9 = vector.broadcast %cst_4 : f32 to vector<16x128xf32>
    %10 = arith.maximumf %3, %9 : vector<16x128xf32>
    %11 = arith.mulf %3, %4 : vector<16x128xf32>
    %12 = arith.subf %10, %11 : vector<16x128xf32>
    %13 = math.log1p %8 : vector<16x128xf32>
    %14 = arith.addf %12, %13 : vector<16x128xf32>
    %cst_5 = arith.constant 0.000000e+00 : f32
    %15 = vector.broadcast %cst_5 : f32 to vector<16x128xf32>
    %16 = arith.cmpf oge, %3, %15 : vector<16x128xf32>
    %cst_6 = arith.constant 5.000000e-01 : f32
    %17 = vector.broadcast %cst_6 : f32 to vector<16x128xf32>
    %18 = arith.cmpf oge, %4, %17 : vector<16x128xf32>
    %19 = arith.xori %16, %18 : vector<16x128xi1>
    %cst_7 = arith.constant dense<true> : vector<16x128xi1>
    %20 = arith.xori %19, %cst_7 : vector<16x128xi1>
    %cst_8 = arith.constant 1.000000e+00 : f32
    %21 = vector.broadcast %cst_8 : f32 to vector<16x128xf32>
    %22 = arith.select %20, %8, %21 : vector<16x128xi1>, vector<16x128xf32>
    %cst_9 = arith.constant 1.000000e+00 : f32
    %23 = vector.broadcast %cst_9 : f32 to vector<16x128xf32>
    %24 = arith.addf %23, %8 : vector<16x128xf32>
    %25 = tpu.reciprocal %24 {approx = true} : vector<16x128xf32> -> vector<16x128xf32>
    %26 = arith.mulf %22, %25 : vector<16x128xf32>
    %27 = arith.mulf %26, %26 : vector<16x128xf32>
    %cst_10 = arith.constant 1.000000e+00 : f32
    %28 = vector.broadcast %cst_10 : f32 to vector<16x128xf32>
    %29 = arith.mulf %28, %27 : vector<16x128xf32>
    %30 = arith.mulf %29, %14 : vector<16x128xf32>
    %c1_i32 = arith.constant 1 : i32
    %31 = arith.muli %arg0, %c1_i32 : i32
    %32 = arith.addi %31, %arg1 : i32
    %c16_i32 = arith.constant 16 : i32
    %33 = arith.muli %32, %c16_i32 : i32
    %c16_i32_11 = arith.constant 16 : i32
    %34 = arith.addi %33, %c16_i32_11 : i32
    %c16_i32_12 = arith.constant 16 : i32
    %35 = arith.cmpi sle, %34, %c16_i32_12 : i32
    %36 = arith.extui %35 : i1 to i32
    %c0_i32_13 = arith.constant 0 : i32
    %37 = arith.cmpi ne, %36, %c0_i32_13 : i32
    scf.if %37 {
      %c0_19 = arith.constant 0 : index
      %c0_20 = arith.constant 0 : index
      %45 = vector.load %arg5[%c0_19, %c0_20] : memref<8x128xf32, #tpu.memory_space<vmem>>, vector<8x128xf32>
      %46 = vector.shape_cast %30 : vector<16x128xf32> to vector<2x8x128xf32>
      %cst_21 = arith.constant dense<0.000000e+00> : vector<8x128xf32>
      %47 = vector.multi_reduction <add>, %46, %cst_21 [0] : vector<2x8x128xf32> to vector<8x128xf32>
      %48 = arith.addf %45, %47 : vector<8x128xf32>
      %c0_22 = arith.constant 0 : index
      %c0_23 = arith.constant 0 : index
      %49 = vector.load %arg5[%c0_22, %c0_23] : memref<8x128xf32, #tpu.memory_space<vmem>>, vector<8x128xf32>
      tpu.vector_store %arg5[%c0_22, %c0_23], %48 {strides = array<i32>} : memref<8x128xf32, #tpu.memory_space<vmem>>, vector<8x128xf32>,
    } else {
    }
    %c16_i32_14 = arith.constant 16 : i32
    %38 = arith.addi %33, %c16_i32_14 : i32
    %c16_i32_15 = arith.constant 16 : i32
    %39 = arith.cmpi sgt, %38, %c16_i32_15 : i32
    %40 = arith.extui %39 : i1 to i32
    %c0_i32_16 = arith.constant 0 : i32
    %41 = arith.cmpi ne, %40, %c0_i32_16 : i32
    scf.if %41 {
      %45 = tpu.iota {dimensions = array<i32: 0>} : vector<16x128xi32>
      %46 = vector.broadcast %33 : i32 to vector<16x128xi32>
      %47 = arith.addi %46, %45 : vector<16x128xi32>
      %c16_i32_19 = arith.constant 16 : i32
      %48 = vector.broadcast %c16_i32_19 : i32 to vector<16x128xi32>
      %49 = arith.cmpi slt, %47, %48 : vector<16x128xi32>
      %cst_20 = arith.constant 0.000000e+00 : f32
      %50 = vector.broadcast %cst_20 : f32 to vector<16x128xf32>
      %51 = arith.select %49, %30, %50 : vector<16x128xi1>, vector<16x128xf32>
      %c0_21 = arith.constant 0 : index
      %c0_22 = arith.constant 0 : index
      %52 = vector.load %arg5[%c0_21, %c0_22] : memref<8x128xf32, #tpu.memory_space<vmem>>, vector<8x128xf32>
      %53 = vector.shape_cast %51 : vector<16x128xf32> to vector<2x8x128xf32>
      %cst_23 = arith.constant dense<0.000000e+00> : vector<8x128xf32>
      %54 = vector.multi_reduction <add>, %53, %cst_23 [0] : vector<2x8x128xf32> to vector<8x128xf32>
      %55 = arith.addf %52, %54 : vector<8x128xf32>
      %c0_24 = arith.constant 0 : index
      %c0_25 = arith.constant 0 : index
      %56 = vector.load %arg5[%c0_24, %c0_25] : memref<8x128xf32, #tpu.memory_space<vmem>>, vector<8x128xf32>
      tpu.vector_store %arg5[%c0_24, %c0_25], %55 {strides = array<i32>} : memref<8x128xf32, #tpu.memory_space<vmem>>, vector<8x128xf32>,
    } else {
    }
    %c0_i32_17 = arith.constant 0 : i32
    %42 = arith.cmpi eq, %arg1, %c0_i32_17 : i32
    %43 = arith.extui %42 : i1 to i32
    %c0_i32_18 = arith.constant 0 : i32
    %44 = arith.cmpi ne, %43, %c0_i32_18 : i32
    scf.if %44 {
      %c0_19 = arith.constant 0 : index
      %c0_20 = arith.constant 0 : index
      %45 = vector.load %arg5[%c0_19, %c0_20] : memref<8x128xf32, #tpu.memory_space<vmem>>, vector<8x128xf32>
      %c0_21 = arith.constant 0 : index
      %c0_22 = arith.constant 0 : index
      %c0_23 = arith.constant 0 : index
      %46 = vector.load %arg4[%c0_21, %c0_22, %c0_23] : memref<1x8x128xf32, #tpu.memory_space<vmem>>, vector<1x8x128xf32>
      %47 = vector.shape_cast %46 : vector<1x8x128xf32> to vector<8x128xf32>
      %48 = vector.shape_cast %45 : vector<8x128xf32> to vector<1x8x128xf32>
      tpu.vector_store %arg4[%c0_21, %c0_22, %c0_23], %48 {strides = array<i32>} : memref<1x8x128xf32, #tpu.memory_space<vmem>>, vector<1x8x128xf32>,
    } else {
    }
    return
  }
  func.func @transform_0(%arg0: i32, %arg1: i32) -> (i32, i32) {
    %c1_i32 = arith.constant 1 : i32
    %0 = arith.muli %arg0, %c1_i32 : i32
    %1 = arith.addi %0, %arg1 : i32
    %c0_i32 = arith.constant 0 : i32
    %2 = arith.minsi %1, %c0_i32 : i32
    %c0_i32_0 = arith.constant 0 : i32
    %c0_i32_1 = arith.constant 0 : i32
    return %2, %c0_i32_0 : i32, i32
  }
  func.func @transform_1(%arg0: i32, %arg1: i32) -> (i32, i32) {
    %c1_i32 = arith.constant 1 : i32
    %0 = arith.muli %arg0, %c1_i32 : i32
    %1 = arith.addi %0, %arg1 : i32
    %c0_i32 = arith.constant 0 : i32
    %2 = arith.minsi %1, %c0_i32 : i32
    %c0_i32_0 = arith.constant 0 : i32
    %c0_i32_1 = arith.constant 0 : i32
    return %2, %c0_i32_0 : i32, i32
  }
  func.func @transform_2(%arg0: i32, %arg1: i32) -> (i32, i32, i32) {
    %c0_i32 = arith.constant 0 : i32
    %c0_i32_0 = arith.constant 0 : i32
    %c0_i32_1 = arith.constant 0 : i32
    return %arg0, %c0_i32, %c0_i32_0 : i32, i32, i32
  }
}

</mosaic_0001>

<llo_original>
// kernel: tpu_custom_call.1
$region0: #{tpu_custom_call.1}
  #allocation0 [shape = 'u32[]', space=smem, size = 0x4, offset = 0x4, fixed_abs, tag = 'smem constant byte address 0x4 - core index']
  #allocation1 [shape = 'u32[144,128]{1,0:T(1,128)}', space=vmem, size = 0x12000, scoped, tag = 'internal scratch']
  #allocation2 [shape = 'f32[8,128]{1,0:T(8,128)}', space=vmem, size = 0x1000, scoped, tag = 'scratch operand']
  %s0 = inlined_call_operand.hbm [shape: f32[16,128], index: 0, kind: input, shape index: {}]
  %s1 = inlined_call_operand.hbm [shape: f32[16,128], index: 1, kind: input, shape index: {}]
  %s2 = inlined_call_operand.hbm [shape: f32[1,8,128], index: 2, kind: output, shape index: {}]
  %s3 = sld [smem:[#allocation0]]
  $region42: #{tpu_custom_call.1} parent=0
    _
  %s5 = ssub.s32 1, %s3
  %s6 = scalar_select 0, %s5, %s3
  $region1: #{tpu_custom_call.1} parent=0
    #allocation3 [shape = 'u8[8192]{0}', space=vmem, size = 0x2000, scoped, tag = 'input window, operand 0, single buffered']
    #allocation4 [shape = 's32[1]{0}', space=sflag, size = 0x4, scoped, tag = 'scoped memory for tpu_custom_call.1']
    #allocation5 [shape = 's32[1]{0}', space=sflag, size = 0x4, scoped, tag = 'scoped memory for tpu_custom_call.1']
    #allocation6 [shape = 'u8[8192]{0}', space=vmem, size = 0x2000, scoped, tag = 'input window, operand 1, single buffered']
    #allocation7 [shape = 's32[1]{0}', space=sflag, size = 0x4, scoped, tag = 'scoped memory for tpu_custom_call.1']
    #allocation8 [shape = 'u8[4096]{0}', space=vmem, size = 0x1000, scoped, tag = 'output window, operand 0, single buffered']
    %7 = vsyncpa [#allocation4], 0
    %8 = vsyncpa [#allocation7], 0
    %9 = vsyncpa [#allocation5], 0
    // Predicated region
    $region2: #{tpu_custom_call.1} parent=1 // pred_check
      _
    $region3: #{tpu_custom_call.1} parent=1 // pred_check_branch
      %11 = sbr.rel (0) target = $region5
    $region4: #{tpu_custom_call.1} parent=1 // pred_region
      %s12 = sadd.s32 0, 0
      %p13 = scmp.lt.s32.totalorder %s12, 0
      %s14 = scalar_select %p13, %s12, 0
      %s15 = smul.u32 2, %s14
      %s17 = ssub.s32 256, 256
      %18 = vsyncadd [#allocation4], %s17
      %s19 = smul.addr %s15, 128
      %s20 = scalar_lea.hbm %s0, %s19
      %s21 = sshll.u32 [#allocation3], 4
      %s22 = int_to_ptr.vmem [resolvable:$true] %s21
      %27 = dma.hbm_to_vmem [thread:$0]  %s20, 256, %s22, [#allocation4], 128, 128, 8
    $region5: #{tpu_custom_call.1} parent=1 // pred_fallthru
      _
    // Predicated region
    $region6: #{tpu_custom_call.1} parent=1 // pred_check
      _
    $region7: #{tpu_custom_call.1} parent=1 // pred_check_branch
      %29 = sbr.rel (0) target = $region9
    $region8: #{tpu_custom_call.1} parent=1 // pred_region
      %s30 = sadd.s32 0, 0
      %p31 = scmp.lt.s32.totalorder %s30, 0
      %s32 = scalar_select %p31, %s30, 0
      %s33 = smul.u32 2, %s32
      %s35 = ssub.s32 256, 256
      %36 = vsyncadd [#allocation7], %s35
      %s37 = smul.addr %s33, 128
      %s38 = scalar_lea.hbm %s1, %s37
      %s39 = sshll.u32 [#allocation6], 4
      %s40 = int_to_ptr.vmem [resolvable:$true] %s39
      %45 = dma.hbm_to_vmem [thread:$0]  %s38, 256, %s40, [#allocation7], 128, 128, 8
    $region9: #{tpu_custom_call.1} parent=1 // pred_fallthru
      _
    // Predicated region
    $region10: #{tpu_custom_call.1} parent=1 // pred_check
      _
    $region11: #{tpu_custom_call.1} parent=1 // pred_check_branch
      %47 = sbr.rel (0) target = $region13
    $region12: #{tpu_custom_call.1} parent=1 // pred_region
      %48 = dma.done [#allocation4], 256
    $region13: #{tpu_custom_call.1} parent=1 // pred_fallthru
      _
    // Predicated region
    $region14: #{tpu_custom_call.1} parent=1 // pred_check
      _
    $region15: #{tpu_custom_call.1} parent=1 // pred_check_branch
      %50 = sbr.rel (0) target = $region17
    $region16: #{tpu_custom_call.1} parent=1 // pred_region
      %51 = dma.done [#allocation7], 256
    $region17: #{tpu_custom_call.1} parent=1 // pred_fallthru
      _
    %s52 = sadd.s32 0, 0
    %p53 = scmp.lt.s32.totalorder %s52, 0
    %s54 = scalar_select %p53, %s52, 0
    %s55 = smul.u32 2, %s54
    %s56 = sadd.s32 0, 0
    %p57 = scmp.lt.s32.totalorder %s56, 0
    %s58 = scalar_select %p57, %s56, 0
    %s59 = smul.u32 2, %s58
    %p60 = scmp.eq.s32.totalorder 0, 0
    // Predicated region
    $region18: #{tpu_custom_call.1} parent=1 // pred_check
      %p61 = pneg %p60
    $region19: #{tpu_custom_call.1} parent=1 // pred_check_branch
      %63 = sbr.rel (%p61) target = $region21
    $region20: #{tpu_custom_call.1} parent=1 // pred_region
      %64 = vst [vmem:[#allocation2] sm:$0xff] 0.0
    $region21: #{tpu_custom_call.1} parent=1 // pred_fallthru
      _
    %v65 = vld [vmem:[#allocation3] sm:$0xff]
    %v66 = vld [vmem:[#allocation3 + $0x8] sm:$0xff]
    %v67 = vld [vmem:[#allocation6] sm:$0xff]
    %v68 = vld [vmem:[#allocation6 + $0x8] sm:$0xff]
    %v69 = vand.u32 2147483647, %v65
    %v70 = vand.u32 2147483647, %v66
    %v71 = vsub.f32 0.0, %v69
    %v72 = vsub.f32 0.0, %v70
    %v73 = vmul.f32 %v71, 1.442695
    %v74 = vpow.pop %v73
    %v75 = vmul.f32 %v72, 1.442695
    %v76 = vpow.pop %v75
    %v77 = vmax.f32 %v65, 0.0
    %v78 = vmax.f32 %v66, 0.0
    %v79 = vmul.f32 %v65, %v67
    %v80 = vmul.f32 %v66, %v68
    %v81 = vsub.f32 %v77, %v79
    %v82 = vsub.f32 %v78, %v80
    %v83 = vadd.f32 %v74, 1.0
    %v84 = vlog2.pop %v83
    %v85 = vmul.f32 %v84, 0.6931472
    %v86 = vmul.f32 -0.5, %v74
    %v87 = vadd.f32 %v86, 1.0
    %v88 = vmul.f32 %v87, %v74
    %v89 = vand.u32 2147483647, %v74
    %vm90 = vcmp.lt.f32.partialorder %v89, 0.0004427343
    %v91 = vsel %vm90, %v88, %v85
    %v92 = vadd.f32 %v76, 1.0
    %v93 = vlog2.pop %v92
    %v94 = vmul.f32 %v93, 0.6931472
    %v95 = vmul.f32 -0.5, %v76
    %v96 = vadd.f32 %v95, 1.0
    %v97 = vmul.f32 %v96, %v76
    %v98 = vand.u32 2147483647, %v76
    %vm99 = vcmp.lt.f32.partialorder %v98, 0.0004427343
    %v100 = vsel %vm99, %v97, %v94
    %v101 = vadd.f32 %v81, %v91
    %v102 = vadd.f32 %v82, %v100
    %vm103 = vcmp.ge.f32.partialorder %v65, 0.0
    %vm104 = vcmp.ge.f32.partialorder %v66, 0.0
    %vm105 = vcmp.ge.f32.partialorder %v67, 0.5
    %vm106 = vcmp.ge.f32.partialorder %v68, 0.5
    %vm107 = vmxor %vm103, %vm105
    %vm108 = vmxor %vm104, %vm106
    %vm109 = vmxor %vm107, 1
    %vm110 = vmxor %vm108, 1
    %v111 = vsel %vm109, %v74, 1.0
    %v112 = vsel %vm110, %v76, 1.0
    %v113 = vadd.f32 %v74, 1.0
    %v114 = vadd.f32 %v76, 1.0
    %v115 = vrcp.pop %v113
    %v116 = vrcp.pop %v114
    %v117 = vmul.f32 %v111, %v115
    %v118 = vmul.f32 %v112, %v116
    %v119 = vmul.f32 %v117, %v117
    %v120 = vmul.f32 %v118, %v118
    %v121 = vmul.f32 %v119, %v101
    %v122 = vmul.f32 %v120, %v102
    %s123 = sadd.s32 0, 0
    %s124 = smul.u32 %s123, 16
    %s125 = sadd.s32 %s124, 16
    %p126 = scmp.le.s32.totalorder %s125, 16
    // Predicated region
    $region22: #{tpu_custom_call.1} parent=1 // pred_check
      %p127 = pneg %p126
    $region23: #{tpu_custom_call.1} parent=1 // pred_check_branch
      %129 = sbr.rel (%p127) target = $region25
    $region24: #{tpu_custom_call.1} parent=1 // pred_region
      %v130 = vld [vmem:[#allocation2] sm:$0xff]
      %v131 = vadd.f32 %v121, %v122
      %v132 = vadd.f32 %v130, %v131
      %133 = vst [vmem:[#allocation2] sm:$0xff] %v132
    $region25: #{tpu_custom_call.1} parent=1 // pred_fallthru
      _
    %p134 = scmp.gt.s32.totalorder %s125, 16
    // Predicated region
    $region26: #{tpu_custom_call.1} parent=1 // pred_check
      %p135 = pneg %p134
    $region27: #{tpu_custom_call.1} parent=1 // pred_check_branch
      %137 = sbr.rel (%p135) target = $region29
    $region28: #{tpu_custom_call.1} parent=1 // pred_region
      %v138 = vlaneseq
      %v139 = vshrl.u32 %v138, 7
      %v140 = vadd.s32 %v139, 8
      %v141 = vstv %s124
      %v142 = vadd.s32 %v141, %v139
      %v143 = vadd.s32 %v141, %v140
      %vm144 = vcmp.lt.s32.totalorder %v142, 16
      %vm145 = vcmp.lt.s32.totalorder %v143, 16
      %v146 = vsel %vm144, %v121, 0.0
      %v147 = vsel %vm145, %v122, 0.0
      %v148 = vld [vmem:[#allocation2] sm:$0xff]
      %v149 = vadd.f32 %v146, %v147
      %v150 = vadd.f32 %v148, %v149
      %151 = vst [vmem:[#allocation2] sm:$0xff] %v150
    $region29: #{tpu_custom_call.1} parent=1 // pred_fallthru
      _
    // Predicated region
    $region30: #{tpu_custom_call.1} parent=1 // pred_check
      %p152 = pneg %p60
    $region31: #{tpu_custom_call.1} parent=1 // pred_check_branch
      %154 = sbr.rel (%p152) target = $region33
    $region32: #{tpu_custom_call.1} parent=1 // pred_region
      %v155 = vld [vmem:[#allocation2] sm:$0xff]
      %156 = vst [vmem:[#allocation8] sm:$0xff] %v155
    $region33: #{tpu_custom_call.1} parent=1 // pred_fallthru
      _
    // Predicated region
    $region34: #{tpu_custom_call.1} parent=1 // pred_check
      _
    $region35: #{tpu_custom_call.1} parent=1 // pred_check_branch
      %158 = sbr.rel (0) target = $region37
    $region36: #{tpu_custom_call.1} parent=1 // pred_region
      %s160 = ssub.s32 128, 128
      %161 = vsyncadd [#allocation5], %s160
      %s163 = sshll.u32 [#allocation8], 4
      %s164 = int_to_ptr.vmem [resolvable:$true] %s163
      %166 = dma.vmem_to_hbm [thread:$0]  %s164, 128, %s2, [#allocation5]
    $region37: #{tpu_custom_call.1} parent=1 // pred_fallthru
      _
    // Predicated region
    $region38: #{tpu_custom_call.1} parent=1 // pred_check
      _
    $region39: #{tpu_custom_call.1} parent=1 // pred_check_branch
      %168 = sbr.rel (0) target = $region41
    $region40: #{tpu_custom_call.1} parent=1 // pred_region
      %169 = dma.done [#allocation5], 128
    $region41: #{tpu_custom_call.1} parent=1 // pred_fallthru
      _
    %170 = vsyncpa [#allocation4], 1
    %171 = vsyncpa [#allocation7], 1
    %172 = vsyncpa [#allocation5], 1

</llo_original>
